<compile_context>
chip_gen: v7x
topology: tpu7x:2x2x1
jax: 0.10.0
libtpu: 0.0.40
codegen_flags: <defaults>
</compile_context>

<pallas_src>
import jax
import jax.numpy as jnp
from jax.experimental import pallas as pl
from jax.experimental.pallas import tpu as pltpu


def _round_up(x, m):
    return ((x + m - 1) // m) * m


def _round_down(x, m):
    return (x // m) * m


def _vmem_capacity_bytes():
    try:
        info = pltpu.get_tpu_info()
        cap = getattr(info, "vmem_capacity_bytes", None)
        if cap:
            return int(cap)
    except Exception:
        pass
    return 64 * 1024 * 1024  # conservative default (v7x physical VMEM)


def _num_tensorcores():
    try:
        info = pltpu.get_tpu_info()
        for name in ("num_cores", "num_tensorcores", "tensorcores_per_chip", "core_count"):
            v = getattr(info, name, None)
            if v:
                return max(1, min(2, int(v)))
    except Exception:
        pass
    return 1  # safe fallback: single TensorCore (v5e/v6e)


def _make_masked_mse_kernel(n_rows, tile_rows, steps, needs_tail_mask):
    """Kernel: per-step masked squared-error + mask-count reduce into SMEM scalars."""

    def kernel(pred_ref, target_ref, mask_ref, sum_ref, cnt_ref):
        c = pl.program_id(0)   # partial (per-TensorCore) index
        i = pl.program_id(1)   # sequential step within this partial's row range

        @pl.when(i == 0)
        def _():
            sum_ref[0, 0] = jnp.float32(0.0)
            cnt_ref[0, 0] = jnp.float32(0.0)

        keep = mask_ref[...]                           # bool tile, streamed as 1 B/elem
        if needs_tail_mask:
            tr, feat = pred_ref.shape
            row_start = (c * steps + i) * tile_rows    # logical (unclamped) global row
            row_ids = jax.lax.broadcasted_iota(jnp.int32, (tr, feat), 0) + row_start
            keep = jnp.logical_and(keep, row_ids < n_rows)

        diff = pred_ref[...].astype(jnp.float32) - target_ref[...].astype(jnp.float32)
        # select (not multiply) so NaN/Inf garbage in the padded tail cannot propagate
        sq = jnp.where(keep, diff * diff, jnp.float32(0.0))

        sum_ref[0, 0] += jnp.sum(sq)
        cnt_ref[0, 0] += jnp.sum(keep.astype(jnp.float32))

    return kernel


def _reduce(sq_sum, cnt, reduction):
    if reduction == "mean":
        # Matches F.mse_loss on an empty selection: 0/0 -> NaN (intentional).
        return sq_sum / cnt
    if reduction == "sum":
        return sq_sum
    raise ValueError(f"unsupported reduction: {reduction}")


def masked_mse_pallas(pred, target, mask, *, reduction="mean",
                      tile_rows=None, num_partials=None,
                      small_input_threshold=262144):
    """Pallas implementation of MaskedMSELoss.forward.

    pred, target : float arrays (any leading dims, last dim = feature dim)
    mask         : boolean array, same shape as pred
    Returns {'loss': <device scalar>, 'Masked MSE loss': <device scalar>}.
    """
    assert mask is not None, "MaskedMSELoss requires a mask"
    assert pred.shape == target.shape == mask.shape
    mask_bool = mask if mask.dtype == jnp.bool_ else (mask != 0)

    total = int(pred.size)
    if total == 0 or total <= small_input_threshold:
        # Small-input fast path: kernel launch + tiling overhead would dominate.
        mf = mask_bool.astype(jnp.float32)
        d = pred.astype(jnp.float32) - target.astype(jnp.float32)
        loss = _reduce(jnp.sum(d * d * mf), jnp.sum(mf), reduction)
        # TODO(synk): original module returns loss.item(); keep device scalar (no host sync).
        return {"loss": loss, "Masked MSE loss": loss}

    # Natural [rows, feat] view: collapsing leading dims keeps the minor dim, so this
    # reshape is layout-free (no HBM copy), unlike the old padded-slab construction.
    feat = pred.shape[-1] if pred.ndim >= 2 else pred.shape[0]
    pred2 = pred.reshape(-1, feat)
    target2 = target.reshape(-1, feat)
    mask2 = mask_bool.reshape(-1, feat)
    n_rows = pred2.shape[0]

    # ---- Tile sizing from the chip's actual VMEM capacity ----
    vmem_cap = _vmem_capacity_bytes()
    usable_vmem = int(0.75 * vmem_cap)          # never oversubscribe (v7x: ~48 MiB)
    stage_budget = usable_vmem // 4             # per-stage; double-buffered -> ~half of usable
    lane_pad = _round_up(max(feat, 1), 128)     # VMEM lane padding of the minor dim
    bytes_per_row = lane_pad * (pred2.dtype.itemsize + target2.dtype.itemsize + 1)

    if tile_rows is None:
        if n_rows * bytes_per_row <= stage_budget:
            tr = n_rows                          # single tile (full-dim block is legal)
        else:
            tr = max(32, _round_down(stage_budget // bytes_per_row, 32))
    else:
        tr = max(32, _round_down(int(tile_rows), 32))
    if tr > n_rows:
        tr = n_rows                              # full-dim block: always legal

    blocks = -(-n_rows // tr)
    if num_partials is None:
        num_partials = _num_tensorcores()
    num_partials = max(1, min(int(num_partials), blocks))
    steps = -(-blocks // num_partials)
    needs_tail_mask = (num_partials * steps * tr) != n_rows

    # Input index map: clamp the block index so every DMA stays in bounds; the kernel
    # masks any logically-out-of-range rows (based on the *unclamped* offset) to zero.
    if num_partials * steps > blocks:
        def in_index(c, i):
            return (jnp.minimum(c * steps + i, blocks - 1), 0)
    else:
        def in_index(c, i):
            return (c * steps + i, 0)

    tile_spec = pl.BlockSpec((tr, feat), in_index)
    part_spec = pl.BlockSpec((1, 1), lambda c, i: (c, 0), memory_space=pltpu.SMEM)

    # ---- VMEM budget: double-buffered input tiles + headroom, capped below physical ----
    stage_bytes = _round_up(tr, 8) * lane_pad * (
        pred2.dtype.itemsize + target2.dtype.itemsize + 1)
    vmem_limit = min(usable_vmem, max(2 * stage_bytes + (2 << 20), 32 * 1024 * 1024))

    cost = pl.CostEstimate(
        flops=5 * total,
        transcendentals=0,
        bytes_accessed=pred2.nbytes + target2.nbytes + mask2.size + 8 * num_partials,
    )

    kernel = _make_masked_mse_kernel(n_rows, tr, steps, needs_tail_mask)

    part_sum, part_cnt = pl.pallas_call(
        kernel,
        out_shape=(
            jax.ShapeDtypeStruct((num_partials, 1), jnp.float32),
            jax.ShapeDtypeStruct((num_partials, 1), jnp.float32),
        ),
        grid=(num_partials, steps),
        in_specs=[tile_spec, tile_spec, tile_spec],
        out_specs=(part_spec, part_spec),
        compiler_params=pltpu.CompilerParams(
            dimension_semantics=("parallel", "arbitrary"),
            vmem_limit_bytes=int(vmem_limit),
        ),
        cost_estimate=cost,
    )(pred2, target2, mask2)

    sq_sum = jnp.sum(part_sum)
    cnt = jnp.sum(part_cnt)
    loss = _reduce(sq_sum, cnt, reduction)

    # TODO(synk): original module returns loss.item() (host float) for the second key;
    # we return the device scalar to stay jittable / avoid a blocking host sync.
    return {"loss": loss, "Masked MSE loss": loss}


def masked_mse_ref(pred, target, mask, reduction="mean"):
    """Pure-JAX reference matching F.mse_loss(pred[mask], target[mask])."""
    m = mask.astype(jnp.float32)
    sq = (pred.astype(jnp.float32) - target.astype(jnp.float32)) ** 2 * m
    if reduction == "mean":
        return jnp.sum(sq) / jnp.sum(m)
    return jnp.sum(sq)


if __name__ == "__main__":
    key = jax.random.PRNGKey(0)
    k1, k2, k3 = jax.random.split(key, 3)

    # Small synthetic node-feature matrices: 200 nodes x 32 features.
    N, D = 200, 32
    pred = jax.random.normal(k1, (N, D), dtype=jnp.float32)
    target = jax.random.normal(k2, (N, D), dtype=jnp.float32)
    mask = jax.random.bernoulli(k3, p=0.3, shape=(N, D))   # boolean mask

    ref_mean = masked_mse_ref(pred, target, mask, "mean")
    ref_sum = masked_mse_ref(pred, target, mask, "sum")

    # 1) single-tile Pallas path (threshold=0 forces the kernel even at this small size)
    out = masked_mse_pallas(pred, target, mask, reduction="mean",
                            small_input_threshold=0)
    loss = jax.block_until_ready(out["loss"])
    assert jnp.allclose(loss, ref_mean, rtol=1e-5, atol=1e-6), (loss, ref_mean)

    # 2) multi-step path with a ragged row tail (200 rows, 64-row tiles -> 4 blocks)
    out2 = masked_mse_pallas(pred, target, mask, reduction="mean",
                             small_input_threshold=0, tile_rows=64)
    loss2 = jax.block_until_ready(out2["loss"])
    assert jnp.allclose(loss2, ref_mean, rtol=1e-5, atol=1e-6), (loss2, ref_mean)

    # 3) sum reduction on the multi-step path
    out3 = masked_mse_pallas(pred, target, mask, reduction="sum",
                             small_input_threshold=0, tile_rows=64)
    loss3 = jax.block_until_ready(out3["loss"])
    assert jnp.allclose(loss3, ref_sum, rtol=1e-5, atol=1e-4), (loss3, ref_sum)

    # 4) default call (small-input fast path), as a user of the module would invoke it
    out4 = masked_mse_pallas(pred, target, mask, reduction="mean")
    loss4 = jax.block_until_ready(out4["loss"])
    assert jnp.allclose(loss4, ref_mean, rtol=1e-5, atol=1e-6), (loss4, ref_mean)

    print("KERNEL_OK")
</pallas_src>

<mosaic_0001>
module attributes {stable_mosaic.version = 11 : i64} {
  func.func @kernel(%arg0: i32, %arg1: i32, %arg2: memref<200x32xf32, #tpu.memory_space<vmem>>, %arg3: memref<200x32xf32, #tpu.memory_space<vmem>>, %arg4: memref<200x32xi32, #tpu.memory_space<vmem>>, %arg5: memref<1x1xf32, #tpu.memory_space<smem>>, %arg6: memref<1x1xf32, #tpu.memory_space<smem>>) attributes {dimension_semantics = [#tpu.dimension_semantics<parallel>, #tpu.dimension_semantics<arbitrary>], iteration_bounds = array<i64: 1, 1>, scalar_prefetch = 0 : i64, scratch_operands = 0 : i64, tpu.core_type = #tpu.core_type<tc>, window_params = [{transform_indices = @transform_0, window_bounds = array<i64: 200, 32>}, {transform_indices = @transform_1, window_bounds = array<i64: 200, 32>}, {transform_indices = @transform_2, window_bounds = array<i64: 200, 32>}, {transform_indices = @transform_3, window_bounds = array<i64: 1, 1>}, {transform_indices = @transform_4, window_bounds = array<i64: 1, 1>}]} {
    %c0_i32 = arith.constant 0 : i32
    %0 = arith.cmpi eq, %arg1, %c0_i32 : i32
    %1 = arith.extui %0 : i1 to i32
    %c0_i32_0 = arith.constant 0 : i32
    %2 = arith.cmpi ne, %1, %c0_i32_0 : i32
    scf.if %2 {
      %cst_17 = arith.constant 0.000000e+00 : f32
      %c0_18 = arith.constant 0 : index
      %c0_19 = arith.constant 0 : index
      %27 = memref.load %arg5[%c0_18, %c0_19] : memref<1x1xf32, #tpu.memory_space<smem>>
      memref.store %cst_17, %arg5[%c0_18, %c0_19] : memref<1x1xf32, #tpu.memory_space<smem>>
      %cst_20 = arith.constant 0.000000e+00 : f32
      %c0_21 = arith.constant 0 : index
      %c0_22 = arith.constant 0 : index
      %28 = memref.load %arg6[%c0_21, %c0_22] : memref<1x1xf32, #tpu.memory_space<smem>>
      memref.store %cst_20, %arg6[%c0_21, %c0_22] : memref<1x1xf32, #tpu.memory_space<smem>>
    } else {
    }
    %c0 = arith.constant 0 : index
    %c0_1 = arith.constant 0 : index
    %3 = vector.load %arg4[%c0, %c0_1] : memref<200x32xi32, #tpu.memory_space<vmem>>, vector<200x32xi32>
    %cst = arith.constant dense<0> : vector<200x32xi32>
    %4 = arith.cmpi ne, %3, %cst : vector<200x32xi32>
    %c0_2 = arith.constant 0 : index
    %c0_3 = arith.constant 0 : index
    %5 = vector.load %arg2[%c0_2, %c0_3] : memref<200x32xf32, #tpu.memory_space<vmem>>, vector<200x32xf32>
    %c0_4 = arith.constant 0 : index
    %c0_5 = arith.constant 0 : index
    %6 = vector.load %arg3[%c0_4, %c0_5] : memref<200x32xf32, #tpu.memory_space<vmem>>, vector<200x32xf32>
    %7 = arith.subf %5, %6 : vector<200x32xf32>
    %8 = arith.mulf %7, %7 : vector<200x32xf32>
    %cst_6 = arith.constant 0.000000e+00 : f32
    %9 = vector.broadcast %cst_6 : f32 to vector<200x32xf32>
    %10 = arith.select %4, %8, %9 : vector<200x32xi1>, vector<200x32xf32>
    %c0_7 = arith.constant 0 : index
    %c0_8 = arith.constant 0 : index
    %11 = memref.load %arg5[%c0_7, %c0_8] : memref<1x1xf32, #tpu.memory_space<smem>>
    %12 = vector.shape_cast %10 : vector<200x32xf32> to vector<1x200x32xf32>
    %cst_9 = arith.constant dense<0.000000e+00> : vector<1xf32>
    %13 = vector.multi_reduction <add>, %12, %cst_9 [1, 2] : vector<1x200x32xf32> to vector<1xf32>
    %14 = vector.shape_cast %13 : vector<1xf32> to vector<1x1x1xf32>
    %15 = vector.extract %14[0, 0, 0] : f32 from vector<1x1x1xf32>
    %16 = arith.addf %11, %15 : f32
    %c0_10 = arith.constant 0 : index
    %c0_11 = arith.constant 0 : index
    %17 = memref.load %arg5[%c0_10, %c0_11] : memref<1x1xf32, #tpu.memory_space<smem>>
    memref.store %16, %arg5[%c0_10, %c0_11] : memref<1x1xf32, #tpu.memory_space<smem>>
    %c0_12 = arith.constant 0 : index
    %c0_13 = arith.constant 0 : index
    %18 = memref.load %arg6[%c0_12, %c0_13] : memref<1x1xf32, #tpu.memory_space<smem>>
    %19 = arith.extui %4 : vector<200x32xi1> to vector<200x32xi32>
    %20 = arith.sitofp %19 : vector<200x32xi32> to vector<200x32xf32>
    %21 = vector.shape_cast %20 : vector<200x32xf32> to vector<1x200x32xf32>
    %cst_14 = arith.constant dense<0.000000e+00> : vector<1xf32>
    %22 = vector.multi_reduction <add>, %21, %cst_14 [1, 2] : vector<1x200x32xf32> to vector<1xf32>
    %23 = vector.shape_cast %22 : vector<1xf32> to vector<1x1x1xf32>
    %24 = vector.extract %23[0, 0, 0] : f32 from vector<1x1x1xf32>
    %25 = arith.addf %18, %24 : f32
    %c0_15 = arith.constant 0 : index
    %c0_16 = arith.constant 0 : index
    %26 = memref.load %arg6[%c0_15, %c0_16] : memref<1x1xf32, #tpu.memory_space<smem>>
    memref.store %25, %arg6[%c0_15, %c0_16] : memref<1x1xf32, #tpu.memory_space<smem>>
    return
  }
  func.func @transform_0(%arg0: i32, %arg1: i32) -> (i32, i32) {
    %c1_i32 = arith.constant 1 : i32
    %0 = arith.muli %arg0, %c1_i32 : i32
    %1 = arith.addi %0, %arg1 : i32
    %c0_i32 = arith.constant 0 : i32
    %c0_i32_0 = arith.constant 0 : i32
    return %1, %c0_i32 : i32, i32
  }
  func.func @transform_1(%arg0: i32, %arg1: i32) -> (i32, i32) {
    %c1_i32 = arith.constant 1 : i32
    %0 = arith.muli %arg0, %c1_i32 : i32
    %1 = arith.addi %0, %arg1 : i32
    %c0_i32 = arith.constant 0 : i32
    %c0_i32_0 = arith.constant 0 : i32
    return %1, %c0_i32 : i32, i32
  }
  func.func @transform_2(%arg0: i32, %arg1: i32) -> (i32, i32) {
    %c1_i32 = arith.constant 1 : i32
    %0 = arith.muli %arg0, %c1_i32 : i32
    %1 = arith.addi %0, %arg1 : i32
    %c0_i32 = arith.constant 0 : i32
    %c0_i32_0 = arith.constant 0 : i32
    return %1, %c0_i32 : i32, i32
  }
  func.func @transform_3(%arg0: i32, %arg1: i32) -> (i32, i32) {
    %c0_i32 = arith.constant 0 : i32
    %c0_i32_0 = arith.constant 0 : i32
    return %arg0, %c0_i32 : i32, i32
  }
  func.func @transform_4(%arg0: i32, %arg1: i32) -> (i32, i32) {
    %c0_i32 = arith.constant 0 : i32
    %c0_i32_0 = arith.constant 0 : i32
    return %arg0, %c0_i32 : i32, i32
  }
}

</mosaic_0001>

<llo_original>
// kernel: tpu_custom_call.1
$region0: #{tpu_custom_call.1}
  #allocation0 [shape = 'u32[]', space=smem, size = 0x4, offset = 0x4, fixed_abs, tag = 'smem constant byte address 0x4 - core index']
  #allocation1 [shape = 'u32[144,128]{1,0:T(1,128)}', space=vmem, size = 0x12000, scoped, tag = 'internal scratch']
  %s0 = inlined_call_operand.vmem [shape: f32[200,32], index: 0, kind: input, shape index: {}]
  %s1 = inlined_call_operand.vmem [shape: f32[200,32], index: 1, kind: input, shape index: {}]
  %s2 = inlined_call_operand.vmem [shape: s32[200,32], index: 2, kind: input, shape index: {}]
  %s3 = inlined_call_operand.hbm [shape: f32[1,1], index: 3, kind: output, shape index: {0}]
  %s4 = inlined_call_operand.hbm [shape: f32[1,1], index: 4, kind: output, shape index: {1}]
  %5 = xla_tuple %s3, %s4
  %s6 = sld [smem:[#allocation0]]
  $region34: #{tpu_custom_call.1} parent=0
    _
  %s8 = ssub.s32 1, %s6
  %s9 = scalar_select 0, %s8, %s6
  $region1: #{tpu_custom_call.1} parent=0
    #allocation2 [shape = 'u8[512]{0}', space=smem, size = 0x200, scoped, tag = 'output window, operand 0, single buffered']
    #allocation3 [shape = 's32[1]{0}', space=sflag, size = 0x4, scoped, tag = 'scoped memory for tpu_custom_call.1']
    #allocation4 [shape = 'u8[512]{0}', space=smem, size = 0x200, scoped, tag = 'output window, operand 1, single buffered']
    #allocation5 [shape = 's32[1]{0}', space=sflag, size = 0x4, scoped, tag = 'scoped memory for tpu_custom_call.1']
    %10 = vsyncpa [#allocation3], 0
    %11 = vsyncpa [#allocation5], 0
    // Predicated region
    $region2: #{tpu_custom_call.1} parent=1 // pred_check
      _
    $region3: #{tpu_custom_call.1} parent=1 // pred_check_branch
      %13 = sbr.rel (0) target = $region5
    $region4: #{tpu_custom_call.1} parent=1 // pred_region
      %s14 = sadd.s32 0, 0
      %s15 = smul.u32 25, %s14
      %p16 = scmp.lt.s32.totalorder %s15, 24
      %s17 = scalar_select %p16, %s15, 24
      %s18 = smul.addr %s17, 8
      %s19 = scalar_lea.vmem %s0, %s18
      %s20 = sadd.s32 0, 0
      %s21 = smul.u32 25, %s20
    $region5: #{tpu_custom_call.1} parent=1 // pred_fallthru
      _
    // Predicated region
    $region6: #{tpu_custom_call.1} parent=1 // pred_check
      _
    $region7: #{tpu_custom_call.1} parent=1 // pred_check_branch
      %23 = sbr.rel (0) target = $region9
    $region8: #{tpu_custom_call.1} parent=1 // pred_region
      %s24 = sadd.s32 0, 0
      %s25 = smul.u32 25, %s24
      %p26 = scmp.lt.s32.totalorder %s25, 24
      %s27 = scalar_select %p26, %s25, 24
      %s28 = smul.addr %s27, 8
      %s29 = scalar_lea.vmem %s1, %s28
      %s30 = sadd.s32 0, 0
      %s31 = smul.u32 25, %s30
    $region9: #{tpu_custom_call.1} parent=1 // pred_fallthru
      _
    // Predicated region
    $region10: #{tpu_custom_call.1} parent=1 // pred_check
      _
    $region11: #{tpu_custom_call.1} parent=1 // pred_check_branch
      %33 = sbr.rel (0) target = $region13
    $region12: #{tpu_custom_call.1} parent=1 // pred_region
      %s34 = sadd.s32 0, 0
      %s35 = smul.u32 25, %s34
      %p36 = scmp.lt.s32.totalorder %s35, 24
      %s37 = scalar_select %p36, %s35, 24
      %s38 = smul.addr %s37, 8
      %s39 = scalar_lea.vmem %s2, %s38
      %s40 = sadd.s32 0, 0
      %s41 = smul.u32 25, %s40
    $region13: #{tpu_custom_call.1} parent=1 // pred_fallthru
      _
    %s42 = sadd.s32 0, 0
    %s43 = smul.u32 25, %s42
    %p44 = scmp.lt.s32.totalorder %s43, 24
    %s45 = scalar_select %p44, %s43, 24
    %s46 = smul.addr %s45, 8
    %s47 = scalar_lea.vmem %s0, %s46
    %s48 = sadd.s32 0, 0
    %s49 = smul.u32 25, %s48
    %p50 = scmp.lt.s32.totalorder %s49, 24
    %s51 = scalar_select %p50, %s49, 24
    %s52 = smul.addr %s51, 8
    %s53 = scalar_lea.vmem %s1, %s52
    %s54 = sadd.s32 0, 0
    %s55 = smul.u32 25, %s54
    %p56 = scmp.lt.s32.totalorder %s55, 24
    %s57 = scalar_select %p56, %s55, 24
    %s58 = smul.addr %s57, 8
    %s59 = scalar_lea.vmem %s2, %s58
    %s60 = sadd.s32 0, 0
    %s61 = smul.u32 25, %s60
    %p62 = scmp.lt.s32.totalorder %s61, 24
    %s63 = scalar_select %p62, %s61, 24
    %s64 = smul.addr %s63, 8
    %s65 = scalar_lea.vmem %s0, %s64
    %s66 = sadd.s32 0, 0
    %s67 = smul.u32 25, %s66
    %s68 = sadd.s32 0, 0
    %s69 = smul.u32 25, %s68
    %p70 = scmp.lt.s32.totalorder %s69, 24
    %s71 = scalar_select %p70, %s69, 24
    %s72 = smul.addr %s71, 8
    %s73 = scalar_lea.vmem %s1, %s72
    %s74 = sadd.s32 0, 0
    %s75 = smul.u32 25, %s74
    %s76 = sadd.s32 0, 0
    %s77 = smul.u32 25, %s76
    %p78 = scmp.lt.s32.totalorder %s77, 24
    %s79 = scalar_select %p78, %s77, 24
    %s80 = smul.addr %s79, 8
    %s81 = scalar_lea.vmem %s2, %s80
    %s82 = sadd.s32 0, 0
    %s83 = smul.u32 25, %s82
    %p84 = scmp.eq.s32.totalorder 0, 0
    // Predicated region
    $region14: #{tpu_custom_call.1} parent=1 // pred_check
      %p85 = pneg %p84
    $region15: #{tpu_custom_call.1} parent=1 // pred_check_branch
      %87 = sbr.rel (%p85) target = $region17
    $region16: #{tpu_custom_call.1} parent=1 // pred_region
      %s88 = scalar_lea.smem [#allocation2], 0
      %89 = sst [smem:[%s88]] 0.0
      %s90 = scalar_lea.smem [#allocation4], 0
      %91 = sst [smem:[%s90]] 0.0
    $region17: #{tpu_custom_call.1} parent=1 // pred_fallthru
      _
    %v92 = vld [vmem:[%s81] sm:$0xff]
    %v93 = vld [vmem:[%s81 + $0x8] sm:$0xff]
    %v94 = vld [vmem:[%s81 + $0x10] sm:$0xff]
    %v95 = vld [vmem:[%s81 + $0x18] sm:$0xff]
    %v96 = vld [vmem:[%s81 + $0x20] sm:$0xff]
    %v97 = vld [vmem:[%s81 + $0x28] sm:$0xff]
    %v98 = vld [vmem:[%s81 + $0x30] sm:$0xff]
    %v99 = vld [vmem:[%s81 + $0x38] sm:$0xff]
    %v100 = vld [vmem:[%s81 + $0x40] sm:$0xff]
    %v101 = vld [vmem:[%s81 + $0x48] sm:$0xff]
    %v102 = vld [vmem:[%s81 + $0x50] sm:$0xff]
    %v103 = vld [vmem:[%s81 + $0x58] sm:$0xff]
    %v104 = vld [vmem:[%s81 + $0x60] sm:$0xff]
    %v105 = vld [vmem:[%s81 + $0x68] sm:$0xff]
    %v106 = vld [vmem:[%s81 + $0x70] sm:$0xff]
    %v107 = vld [vmem:[%s81 + $0x78] sm:$0xff]
    %v108 = vld [vmem:[%s81 + $0x80] sm:$0xff]
    %v109 = vld [vmem:[%s81 + $0x88] sm:$0xff]
    %v110 = vld [vmem:[%s81 + $0x90] sm:$0xff]
    %v111 = vld [vmem:[%s81 + $0x98] sm:$0xff]
    %v112 = vld [vmem:[%s81 + $0xa0] sm:$0xff]
    %v113 = vld [vmem:[%s81 + $0xa8] sm:$0xff]
    %v114 = vld [vmem:[%s81 + $0xb0] sm:$0xff]
    %v115 = vld [vmem:[%s81 + $0xb8] sm:$0xff]
    %v116 = vld [vmem:[%s81 + $0xc0] sm:$0xff]
    %vm117 = vcmp.ne.s32.totalorder %v92, 0
    %vm118 = vcmp.ne.s32.totalorder %v93, 0
    %vm119 = vcmp.ne.s32.totalorder %v94, 0
    %vm120 = vcmp.ne.s32.totalorder %v95, 0
    %vm121 = vcmp.ne.s32.totalorder %v96, 0
    %vm122 = vcmp.ne.s32.totalorder %v97, 0
    %vm123 = vcmp.ne.s32.totalorder %v98, 0
    %vm124 = vcmp.ne.s32.totalorder %v99, 0
    %vm125 = vcmp.ne.s32.totalorder %v100, 0
    %vm126 = vcmp.ne.s32.totalorder %v101, 0
    %vm127 = vcmp.ne.s32.totalorder %v102, 0
    %vm128 = vcmp.ne.s32.totalorder %v103, 0
    %vm129 = vcmp.ne.s32.totalorder %v104, 0
    %vm130 = vcmp.ne.s32.totalorder %v105, 0
    %vm131 = vcmp.ne.s32.totalorder %v106, 0
    %vm132 = vcmp.ne.s32.totalorder %v107, 0
    %vm133 = vcmp.ne.s32.totalorder %v108, 0
    %vm134 = vcmp.ne.s32.totalorder %v109, 0
    %vm135 = vcmp.ne.s32.totalorder %v110, 0
    %vm136 = vcmp.ne.s32.totalorder %v111, 0
    %vm137 = vcmp.ne.s32.totalorder %v112, 0
    %vm138 = vcmp.ne.s32.totalorder %v113, 0
    %vm139 = vcmp.ne.s32.totalorder %v114, 0
    %vm140 = vcmp.ne.s32.totalorder %v115, 0
    %vm141 = vcmp.ne.s32.totalorder %v116, 0
    %v142 = vld [vmem:[%s65] sm:$0xff]
    %v143 = vld [vmem:[%s65 + $0x8] sm:$0xff]
    %v144 = vld [vmem:[%s65 + $0x10] sm:$0xff]
    %v145 = vld [vmem:[%s65 + $0x18] sm:$0xff]
    %v146 = vld [vmem:[%s65 + $0x20] sm:$0xff]
    %v147 = vld [vmem:[%s65 + $0x28] sm:$0xff]
    %v148 = vld [vmem:[%s65 + $0x30] sm:$0xff]
    %v149 = vld [vmem:[%s65 + $0x38] sm:$0xff]
    %v150 = vld [vmem:[%s65 + $0x40] sm:$0xff]
    %v151 = vld [vmem:[%s65 + $0x48] sm:$0xff]
    %v152 = vld [vmem:[%s65 + $0x50] sm:$0xff]
    %v153 = vld [vmem:[%s65 + $0x58] sm:$0xff]
    %v154 = vld [vmem:[%s65 + $0x60] sm:$0xff]
    %v155 = vld [vmem:[%s65 + $0x68] sm:$0xff]
    %v156 = vld [vmem:[%s65 + $0x70] sm:$0xff]
    %v157 = vld [vmem:[%s65 + $0x78] sm:$0xff]
    %v158 = vld [vmem:[%s65 + $0x80] sm:$0xff]
    %v159 = vld [vmem:[%s65 + $0x88] sm:$0xff]
    %v160 = vld [vmem:[%s65 + $0x90] sm:$0xff]
    %v161 = vld [vmem:[%s65 + $0x98] sm:$0xff]
    %v162 = vld [vmem:[%s65 + $0xa0] sm:$0xff]
    %v163 = vld [vmem:[%s65 + $0xa8] sm:$0xff]
    %v164 = vld [vmem:[%s65 + $0xb0] sm:$0xff]
    %v165 = vld [vmem:[%s65 + $0xb8] sm:$0xff]
    %v166 = vld [vmem:[%s65 + $0xc0] sm:$0xff]
    %v167 = vld [vmem:[%s73] sm:$0xff]
    %v168 = vld [vmem:[%s73 + $0x8] sm:$0xff]
    %v169 = vld [vmem:[%s73 + $0x10] sm:$0xff]
    %v170 = vld [vmem:[%s73 + $0x18] sm:$0xff]
    %v171 = vld [vmem:[%s73 + $0x20] sm:$0xff]
    %v172 = vld [vmem:[%s73 + $0x28] sm:$0xff]
    %v173 = vld [vmem:[%s73 + $0x30] sm:$0xff]
    %v174 = vld [vmem:[%s73 + $0x38] sm:$0xff]
    %v175 = vld [vmem:[%s73 + $0x40] sm:$0xff]
    %v176 = vld [vmem:[%s73 + $0x48] sm:$0xff]
    %v177 = vld [vmem:[%s73 + $0x50] sm:$0xff]
    %v178 = vld [vmem:[%s73 + $0x58] sm:$0xff]
    %v179 = vld [vmem:[%s73 + $0x60] sm:$0xff]
    %v180 = vld [vmem:[%s73 + $0x68] sm:$0xff]
    %v181 = vld [vmem:[%s73 + $0x70] sm:$0xff]
    %v182 = vld [vmem:[%s73 + $0x78] sm:$0xff]
    %v183 = vld [vmem:[%s73 + $0x80] sm:$0xff]
    %v184 = vld [vmem:[%s73 + $0x88] sm:$0xff]
    %v185 = vld [vmem:[%s73 + $0x90] sm:$0xff]
    %v186 = vld [vmem:[%s73 + $0x98] sm:$0xff]
    %v187 = vld [vmem:[%s73 + $0xa0] sm:$0xff]
    %v188 = vld [vmem:[%s73 + $0xa8] sm:$0xff]
    %v189 = vld [vmem:[%s73 + $0xb0] sm:$0xff]
    %v190 = vld [vmem:[%s73 + $0xb8] sm:$0xff]
    %v191 = vld [vmem:[%s73 + $0xc0] sm:$0xff]
    %v192 = vsub.f32 %v142, %v167
    %v193 = vsub.f32 %v143, %v168
    %v194 = vsub.f32 %v144, %v169
    %v195 = vsub.f32 %v145, %v170
    %v196 = vsub.f32 %v146, %v171
    %v197 = vsub.f32 %v147, %v172
    %v198 = vsub.f32 %v148, %v173
    %v199 = vsub.f32 %v149, %v174
    %v200 = vsub.f32 %v150, %v175
    %v201 = vsub.f32 %v151, %v176
    %v202 = vsub.f32 %v152, %v177
    %v203 = vsub.f32 %v153, %v178
    %v204 = vsub.f32 %v154, %v179
    %v205 = vsub.f32 %v155, %v180
    %v206 = vsub.f32 %v156, %v181
    %v207 = vsub.f32 %v157, %v182
    %v208 = vsub.f32 %v158, %v183
    %v209 = vsub.f32 %v159, %v184
    %v210 = vsub.f32 %v160, %v185
    %v211 = vsub.f32 %v161, %v186
    %v212 = vsub.f32 %v162, %v187
    %v213 = vsub.f32 %v163, %v188
    %v214 = vsub.f32 %v164, %v189
    %v215 = vsub.f32 %v165, %v190
    %v216 = vsub.f32 %v166, %v191
    %v217 = vmul.f32 %v192, %v192
    %v218 = vmul.f32 %v193, %v193
    %v219 = vmul.f32 %v194, %v194
    %v220 = vmul.f32 %v195, %v195
    %v221 = vmul.f32 %v196, %v196
    %v222 = vmul.f32 %v197, %v197
    %v223 = vmul.f32 %v198, %v198
    %v224 = vmul.f32 %v199, %v199
    %v225 = vmul.f32 %v200, %v200
    %v226 = vmul.f32 %v201, %v201
    %v227 = vmul.f32 %v202, %v202
    %v228 = vmul.f32 %v203, %v203
    %v229 = vmul.f32 %v204, %v204
    %v230 = vmul.f32 %v205, %v205
    %v231 = vmul.f32 %v206, %v206
    %v232 = vmul.f32 %v207, %v207
    %v233 = vmul.f32 %v208, %v208
    %v234 = vmul.f32 %v209, %v209
    %v235 = vmul.f32 %v210, %v210
    %v236 = vmul.f32 %v211, %v211
    %v237 = vmul.f32 %v212, %v212
    %v238 = vmul.f32 %v213, %v213
    %v239 = vmul.f32 %v214, %v214
    %v240 = vmul.f32 %v215, %v215
    %v241 = vmul.f32 %v216, %v216
    %v242 = vsel %vm117, %v217, 0.0
    %v243 = vsel %vm118, %v218, 0.0
    %v244 = vsel %vm119, %v219, 0.0
    %v245 = vsel %vm120, %v220, 0.0
    %v246 = vsel %vm121, %v221, 0.0
    %v247 = vsel %vm122, %v222, 0.0
    %v248 = vsel %vm123, %v223, 0.0
    %v249 = vsel %vm124, %v224, 0.0
    %v250 = vsel %vm125, %v225, 0.0
    %v251 = vsel %vm126, %v226, 0.0
    %v252 = vsel %vm127, %v227, 0.0
    %v253 = vsel %vm128, %v228, 0.0
    %v254 = vsel %vm129, %v229, 0.0
    %v255 = vsel %vm130, %v230, 0.0
    %v256 = vsel %vm131, %v231, 0.0
    %v257 = vsel %vm132, %v232, 0.0
    %v258 = vsel %vm133, %v233, 0.0
    %v259 = vsel %vm134, %v234, 0.0
    %v260 = vsel %vm135, %v235, 0.0
    %v261 = vsel %vm136, %v236, 0.0
    %v262 = vsel %vm137, %v237, 0.0
    %v263 = vsel %vm138, %v238, 0.0
    %v264 = vsel %vm139, %v239, 0.0
    %v265 = vsel %vm140, %v240, 0.0
    %v266 = vsel %vm141, %v241, 0.0
    %s267 = sld [smem:[#allocation2]]
    %vm268 = vcmask 261120
    %v269 = vsel %vm268, %v242, 0.0
    %v270 = vsel %vm268, %v243, 0.0
    %v271 = vadd.f32 %v269, %v270
    %v272 = vsel %vm268, %v244, 0.0
    %v273 = vadd.f32 %v271, %v272
    %v274 = vsel %vm268, %v245, 0.0
    %v275 = vadd.f32 %v273, %v274
    %v276 = vsel %vm268, %v246, 0.0
    %v277 = vadd.f32 %v275, %v276
    %v278 = vsel %vm268, %v247, 0.0
    %v279 = vadd.f32 %v277, %v278
    %v280 = vsel %vm268, %v248, 0.0
    %v281 = vadd.f32 %v279, %v280
    %v282 = vsel %vm268, %v249, 0.0
    %v283 = vadd.f32 %v281, %v282
    %v284 = vsel %vm268, %v250, 0.0
    %v285 = vadd.f32 %v283, %v284
    %v286 = vsel %vm268, %v251, 0.0
    %v287 = vadd.f32 %v285, %v286
    %v288 = vsel %vm268, %v252, 0.0
    %v289 = vadd.f32 %v287, %v288
    %v290 = vsel %vm268, %v253, 0.0
    %v291 = vadd.f32 %v289, %v290
    %v292 = vsel %vm268, %v254, 0.0
    %v293 = vadd.f32 %v291, %v292
    %v294 = vsel %vm268, %v255, 0.0
    %v295 = vadd.f32 %v293, %v294
    %v296 = vsel %vm268, %v256, 0.0
    %v297 = vadd.f32 %v295, %v296
    %v298 = vsel %vm268, %v257, 0.0
    %v299 = vadd.f32 %v297, %v298
    %v300 = vsel %vm268, %v258, 0.0
    %v301 = vadd.f32 %v299, %v300
    %v302 = vsel %vm268, %v259, 0.0
    %v303 = vadd.f32 %v301, %v302
    %v304 = vsel %vm268, %v260, 0.0
    %v305 = vadd.f32 %v303, %v304
    %v306 = vsel %vm268, %v261, 0.0
    %v307 = vadd.f32 %v305, %v306
    %v308 = vsel %vm268, %v262, 0.0
    %v309 = vadd.f32 %v307, %v308
    %v310 = vsel %vm268, %v263, 0.0
    %v311 = vadd.f32 %v309, %v310
    %v312 = vsel %vm268, %v264, 0.0
    %v313 = vadd.f32 %v311, %v312
    %v314 = vsel %vm268, %v265, 0.0
    %v315 = vadd.f32 %v313, %v314
    %v316 = vsel %vm268, %v266, 0.0
    %v317 = vadd.f32 %v315, %v316
    %318 = vadd.xlane.f32.xlu0 %v317
    %v319 = vpop.xlane.xlu0 %318
    %v320 = vrot.slane %v319, 4
    %v321 = vadd.f32 %v319, %v320
    %v322 = vrot.slane %v321, 2
    %v323 = vadd.f32 %v321, %v322
    %v324 = vrot.slane %v323, 1
    %v325 = vadd.f32 %v323, %v324
    %s326 = vtos %v325
    %s327 = sadd.f32 %s267, %s326
    %s328 = scalar_lea.smem [#allocation2], 0
    %329 = sst [smem:[%s328]] %s327
    %s330 = sld [smem:[#allocation4]]
    %v331 = vsel %vm117, 1, 0
    %v332 = vsel %vm118, 1, 0
    %v333 = vsel %vm119, 1, 0
    %v334 = vsel %vm120, 1, 0
    %v335 = vsel %vm121, 1, 0
    %v336 = vsel %vm122, 1, 0
    %v337 = vsel %vm123, 1, 0
    %v338 = vsel %vm124, 1, 0
    %v339 = vsel %vm125, 1, 0
    %v340 = vsel %vm126, 1, 0
    %v341 = vsel %vm127, 1, 0
    %v342 = vsel %vm128, 1, 0
    %v343 = vsel %vm129, 1, 0
    %v344 = vsel %vm130, 1, 0
    %v345 = vsel %vm131, 1, 0
    %v346 = vsel %vm132, 1, 0
    %v347 = vsel %vm133, 1, 0
    %v348 = vsel %vm134, 1, 0
    %v349 = vsel %vm135, 1, 0
    %v350 = vsel %vm136, 1, 0
    %v351 = vsel %vm137, 1, 0
    %v352 = vsel %vm138, 1, 0
    %v353 = vsel %vm139, 1, 0
    %v354 = vsel %vm140, 1, 0
    %v355 = vsel %vm141, 1, 0
    %v356 = vcvt.s32.f32 %v331
    %v357 = vcvt.s32.f32 %v332
    %v358 = vcvt.s32.f32 %v333
    %v359 = vcvt.s32.f32 %v334
    %v360 = vcvt.s32.f32 %v335
    %v361 = vcvt.s32.f32 %v336
    %v362 = vcvt.s32.f32 %v337
    %v363 = vcvt.s32.f32 %v338
    %v364 = vcvt.s32.f32 %v339
    %v365 = vcvt.s32.f32 %v340
    %v366 = vcvt.s32.f32 %v341
    %v367 = vcvt.s32.f32 %v342
    %v368 = vcvt.s32.f32 %v343
    %v369 = vcvt.s32.f32 %v344
    %v370 = vcvt.s32.f32 %v345
    %v371 = vcvt.s32.f32 %v346
    %v372 = vcvt.s32.f32 %v347
    %v373 = vcvt.s32.f32 %v348
    %v374 = vcvt.s32.f32 %v349
    %v375 = vcvt.s32.f32 %v350
    %v376 = vcvt.s32.f32 %v351
    %v377 = vcvt.s32.f32 %v352
    %v378 = vcvt.s32.f32 %v353
    %v379 = vcvt.s32.f32 %v354
    %v380 = vcvt.s32.f32 %v355
    %v381 = vsel %vm268, %v356, 0.0
    %v382 = vsel %vm268, %v357, 0.0
    %v383 = vadd.f32 %v381, %v382
    %v384 = vsel %vm268, %v358, 0.0
    %v385 = vadd.f32 %v383, %v384
    %v386 = vsel %vm268, %v359, 0.0
    %v387 = vadd.f32 %v385, %v386
    %v388 = vsel %vm268, %v360, 0.0
    %v389 = vadd.f32 %v387, %v388
    %v390 = vsel %vm268, %v361, 0.0
    %v391 = vadd.f32 %v389, %v390
    %v392 = vsel %vm268, %v362, 0.0
    %v393 = vadd.f32 %v391, %v392
    %v394 = vsel %vm268, %v363, 0.0
    %v395 = vadd.f32 %v393, %v394
    %v396 = vsel %vm268, %v364, 0.0
    %v397 = vadd.f32 %v395, %v396
    %v398 = vsel %vm268, %v365, 0.0
    %v399 = vadd.f32 %v397, %v398
    %v400 = vsel %vm268, %v366, 0.0
    %v401 = vadd.f32 %v399, %v400
    %v402 = vsel %vm268, %v367, 0.0
    %v403 = vadd.f32 %v401, %v402
    %v404 = vsel %vm268, %v368, 0.0
    %v405 = vadd.f32 %v403, %v404
    %v406 = vsel %vm268, %v369, 0.0
    %v407 = vadd.f32 %v405, %v406
    %v408 = vsel %vm268, %v370, 0.0
    %v409 = vadd.f32 %v407, %v408
    %v410 = vsel %vm268, %v371, 0.0
    %v411 = vadd.f32 %v409, %v410
    %v412 = vsel %vm268, %v372, 0.0
    %v413 = vadd.f32 %v411, %v412
    %v414 = vsel %vm268, %v373, 0.0
    %v415 = vadd.f32 %v413, %v414
    %v416 = vsel %vm268, %v374, 0.0
    %v417 = vadd.f32 %v415, %v416
    %v418 = vsel %vm268, %v375, 0.0
    %v419 = vadd.f32 %v417, %v418
    %v420 = vsel %vm268, %v376, 0.0
    %v421 = vadd.f32 %v419, %v420
    %v422 = vsel %vm268, %v377, 0.0
    %v423 = vadd.f32 %v421, %v422
    %v424 = vsel %vm268, %v378, 0.0
    %v425 = vadd.f32 %v423, %v424
    %v426 = vsel %vm268, %v379, 0.0
    %v427 = vadd.f32 %v425, %v426
    %v428 = vsel %vm268, %v380, 0.0
    %v429 = vadd.f32 %v427, %v428
    %430 = vadd.xlane.f32.xlu0 %v429
    %v431 = vpop.xlane.xlu0 %430
    %v432 = vrot.slane %v431, 4
    %v433 = vadd.f32 %v431, %v432
    %v434 = vrot.slane %v433, 2
    %v435 = vadd.f32 %v433, %v434
    %v436 = vrot.slane %v435, 1
    %v437 = vadd.f32 %v435, %v436
    %s438 = vtos %v437
    %s439 = sadd.f32 %s330, %s438
    %s440 = scalar_lea.smem [#allocation4], 0
    %441 = sst [smem:[%s440]] %s439
    // Predicated region
    $region18: #{tpu_custom_call.1} parent=1 // pred_check
      _
    $region19: #{tpu_custom_call.1} parent=1 // pred_check_branch
      %443 = sbr.rel (0) target = $region21
    $region20: #{tpu_custom_call.1} parent=1 // pred_region
      %s445 = ssub.s32 16, 16
      %446 = vsyncadd [#allocation3], %s445
      %449 = dma.smem_to_hbm [#allocation2], 16, %s3, [#allocation3]
    $region21: #{tpu_custom_call.1} parent=1 // pred_fallthru
      _
    // Predicated region
    $region22: #{tpu_custom_call.1} parent=1 // pred_check
      _
    $region23: #{tpu_custom_call.1} parent=1 // pred_check_branch
      %451 = sbr.rel (0) target = $region25
    $region24: #{tpu_custom_call.1} parent=1 // pred_region
      %s453 = ssub.s32 16, 16
      %454 = vsyncadd [#allocation5], %s453
      %457 = dma.smem_to_hbm [#allocation4], 16, %s4, [#allocation5]
    $region25: #{tpu_custom_call.1} parent=1 // pred_fallthru
      _
    // Predicated region
    $region26: #{tpu_custom_call.1} parent=1 // pred_check
      _
    $region27: #{tpu_custom_call.1} parent=1 // pred_check_branch
      %459 = sbr.rel (0) target = $region29
    $region28: #{tpu_custom_call.1} parent=1 // pred_region
      %460 = dma.done [#allocation3], 16
    $region29: #{tpu_custom_call.1} parent=1 // pred_fallthru
      _
    // Predicated region
    $region30: #{tpu_custom_call.1} parent=1 // pred_check
      _
    $region31: #{tpu_custom_call.1} parent=1 // pred_check_branch
      %462 = sbr.rel (0) target = $region33
    $region32: #{tpu_custom_call.1} parent=1 // pred_region
      %463 = dma.done [#allocation5], 16
    $region33: #{tpu_custom_call.1} parent=1 // pred_fallthru
      _
    %464 = sfence
    %465 = vsyncpa [#allocation3], 1
    %466 = vsyncpa [#allocation5], 1

</llo_original>
